<compile_context>
chip_gen: v7x
topology: tpu7x:2x2x1
jax: 0.10.0
libtpu: 0.0.40
codegen_flags: <defaults>
</compile_context>

<pallas_src>
import functools

import jax
import jax.numpy as jnp
from jax.experimental import pallas as pl
from jax.experimental.pallas import tpu as pltpu


def _round_up(x, m):
    return ((x + m - 1) // m) * m


def _pick_tiles(M, OC):
    """M tile 512 (shrink for tiny problems), OC tile 128/256 per MXU width."""
    TM = 512
    while TM > 128 and M <= TM // 2:
        TM //= 2
    TN = 256 if OC > 128 else 128
    return TM, TN


def convblock_kernel(p_ref, w_ref, b_ref, o_ref):
    # bf16 tiles in, MXU matmul with f32 accumulation, f32 bias add, f32 out.
    acc = jnp.dot(p_ref[...], w_ref[...], preferred_element_type=jnp.float32)
    o_ref[...] = (acc + b_ref[...]).astype(o_ref.dtype)


def _im2col_nchw(x, K):
    """x: (N, C, H, W) -> patches (N*OH*OW, C*K*K), matching PyTorch weight layout."""
    N, C, H, W = x.shape
    OH, OW = H - K + 1, W - K + 1
    cols = [x[:, :, i:i + OH, j:j + OW] for i in range(K) for j in range(K)]
    p = jnp.stack(cols, axis=2)                             # (N, C, K*K, OH, OW)
    p = p.reshape(N, C * K * K, OH, OW)
    p = p.transpose(0, 2, 3, 1).reshape(N * OH * OW, C * K * K)
    return p, OH, OW


@functools.partial(jax.jit, static_argnames=("ker_size",))
def conv_block_forward(x, weight, bias, ker_size):
    """ConvBlock forward: ReLU activation then Conv2d(in_ch, out_ch, ker_size).

    x:      (N, C, H, W)   float32
    weight: (OC, C, K, K)  float32 (PyTorch Conv2d layout)
    bias:   (OC,)          float32
    returns (N, OC, OH, OW) float32
    """
    N, C, H, W = x.shape
    OC = weight.shape[0]
    K = ker_size

    # Activation once on the input (f32), then bf16 for the MXU / DMA savings.
    x_act = jnp.maximum(x, 0.0).astype(jnp.bfloat16)

    patches, OH, OW = _im2col_nchw(x_act, K)                # (M, Kd) bf16
    M, Kd = patches.shape

    TM, TN = _pick_tiles(M, OC)
    M_pad = _round_up(M, TM)
    OC_pad = _round_up(OC, TN)

    # Pad only M (rows) and OC (lanes); Kd stays at full extent (no 128-pad).
    p_pad = jnp.pad(patches, ((0, M_pad - M), (0, 0)))                      # bf16
    w2d = weight.reshape(OC, Kd).T.astype(jnp.bfloat16)                     # (Kd, OC)
    w_pad = jnp.pad(w2d, ((0, 0), (0, OC_pad - OC)))                        # bf16
    b_pad = jnp.pad(bias.reshape(1, OC).astype(jnp.float32),
                    ((0, 0), (0, OC_pad - OC)))                             # f32

    grid = (M_pad // TM, OC_pad // TN)

    cost = pl.CostEstimate(
        flops=2 * M_pad * Kd * OC_pad,
        transcendentals=0,
        bytes_accessed=(M_pad * Kd * 2 + Kd * OC_pad * 2
                        + OC_pad * 4 + M_pad * OC_pad * 4),
    )

    out_pad = pl.pallas_call(
        convblock_kernel,
        out_shape=jax.ShapeDtypeStruct((M_pad, OC_pad), jnp.float32),
        grid=grid,
        in_specs=[
            pl.BlockSpec((TM, Kd), lambda i, j: (i, 0)),    # patch rows tile
            pl.BlockSpec((Kd, TN), lambda i, j: (0, j)),    # weight cols tile
            pl.BlockSpec((1, TN), lambda i, j: (0, j)),     # bias tile
        ],
        out_specs=pl.BlockSpec((TM, TN), lambda i, j: (i, j)),
        compiler_params=pltpu.CompilerParams(
            dimension_semantics=("parallel", "parallel")),
        cost_estimate=cost,
    )(p_pad, w_pad, b_pad)

    out = out_pad[:M, :OC]                                  # (N*OH*OW, OC)
    # Module semantics require NCHW output; the NHWC->NCHW transpose is a
    # separate XLA pass (cost_estimate lets the scheduler overlap it).
    out = out.reshape(N, OH, OW, OC).transpose(0, 3, 1, 2)
    return out


if __name__ == "__main__":
    key = jax.random.PRNGKey(0)
    k1, k2, k3 = jax.random.split(key, 3)

    # Small shapes consistent with the module: N=2, C_in=4, H=W=16, K=3, C_out=8
    N, C_in, H, W = 2, 4, 16, 16
    C_out, K = 8, 3

    x = jax.random.normal(k1, (N, C_in, H, W), dtype=jnp.float32)
    weight = jax.random.normal(k2, (C_out, C_in, K, K), dtype=jnp.float32) * 0.1
    bias = jax.random.normal(k3, (C_out,), dtype=jnp.float32) * 0.1

    out = conv_block_forward(x, weight, bias, K)
    out = jax.block_until_ready(out)

    # Reference check against XLA conv (ReLU then valid conv), f32.
    x_act = jnp.maximum(x, 0.0)
    ref = jax.lax.conv_general_dilated(
        x_act, weight, window_strides=(1, 1), padding="VALID",
        dimension_numbers=("NCHW", "OIHW", "NCHW"),
    ) + bias.reshape(1, C_out, 1, 1)

    assert out.shape == (N, C_out, H - K + 1, W - K + 1), out.shape
    # bf16 operands with f32 accumulation -> loose-ish tolerance vs f32 ref.
    assert jnp.allclose(out, ref, atol=2e-2, rtol=2e-2), \
        float(jnp.max(jnp.abs(out - ref)))

    print("KERNEL_OK")
</pallas_src>

<mosaic_0001>
module attributes {stable_mosaic.version = 11 : i64} {
  func.func @convblock_kernel(%arg0: i32, %arg1: i32, %arg2: memref<512x36xbf16, #tpu.memory_space<vmem>>, %arg3: memref<36x128xbf16, #tpu.memory_space<vmem>>, %arg4: memref<1x128xf32, #tpu.memory_space<vmem>>, %arg5: memref<512x128xf32, #tpu.memory_space<vmem>>) attributes {dimension_semantics = [#tpu.dimension_semantics<parallel>, #tpu.dimension_semantics<parallel>], iteration_bounds = array<i64: 1, 1>, scalar_prefetch = 0 : i64, scratch_operands = 0 : i64, tpu.core_type = #tpu.core_type<tc>, window_params = [{transform_indices = @transform_0, window_bounds = array<i64: 512, 36>}, {transform_indices = @transform_1, window_bounds = array<i64: 36, 128>}, {transform_indices = @transform_2, window_bounds = array<i64: 1, 128>}, {transform_indices = @transform_3, window_bounds = array<i64: 512, 128>}]} {
    %c0 = arith.constant 0 : index
    %c0_0 = arith.constant 0 : index
    %0 = vector.load %arg2[%c0, %c0_0] : memref<512x36xbf16, #tpu.memory_space<vmem>>, vector<512x36xbf16>
    %c0_1 = arith.constant 0 : index
    %c0_2 = arith.constant 0 : index
    %1 = vector.load %arg3[%c0_1, %c0_2] : memref<36x128xbf16, #tpu.memory_space<vmem>>, vector<36x128xbf16>
    %cst = arith.constant dense<0.000000e+00> : vector<512x128xf32>
    %2 = tpu.matmul %0, %1, %cst {dimension_numbers = #tpu.dot_dimension_numbers<[1], [0], [0], [1], [0, 0, 1, 1], [], []>} : vector<512x36xbf16>, vector<36x128xbf16>, vector<512x128xf32> -> vector<512x128xf32>
    %c0_3 = arith.constant 0 : index
    %c0_4 = arith.constant 0 : index
    %3 = vector.load %arg4[%c0_3, %c0_4] : memref<1x128xf32, #tpu.memory_space<vmem>>, vector<1x128xf32>
    %4 = vector.broadcast %3 : vector<1x128xf32> to vector<512x128xf32>
    %5 = arith.addf %2, %4 : vector<512x128xf32>
    %c0_5 = arith.constant 0 : index
    %c0_6 = arith.constant 0 : index
    %6 = vector.load %arg5[%c0_5, %c0_6] : memref<512x128xf32, #tpu.memory_space<vmem>>, vector<512x128xf32>
    tpu.vector_store %arg5[%c0_5, %c0_6], %5 {strides = array<i32>} : memref<512x128xf32, #tpu.memory_space<vmem>>, vector<512x128xf32>,
    return
  }
  func.func @transform_0(%arg0: i32, %arg1: i32) -> (i32, i32) {
    %c0_i32 = arith.constant 0 : i32
    %c0_i32_0 = arith.constant 0 : i32
    return %arg0, %c0_i32 : i32, i32
  }
  func.func @transform_1(%arg0: i32, %arg1: i32) -> (i32, i32) {
    %c0_i32 = arith.constant 0 : i32
    %c0_i32_0 = arith.constant 0 : i32
    return %c0_i32, %arg1 : i32, i32
  }
  func.func @transform_2(%arg0: i32, %arg1: i32) -> (i32, i32) {
    %c0_i32 = arith.constant 0 : i32
    %c0_i32_0 = arith.constant 0 : i32
    return %c0_i32, %arg1 : i32, i32
  }
  func.func @transform_3(%arg0: i32, %arg1: i32) -> (i32, i32) {
    %c0_i32 = arith.constant 0 : i32
    return %arg0, %arg1 : i32, i32
  }
}

</mosaic_0001>

<llo_original>
// kernel: conv_block_forward.1
$region0: #{conv_block_forward.1}
  #allocation0 [shape = 'u32[]', space=smem, size = 0x4, offset = 0x4, fixed_abs, tag = 'smem constant byte address 0x4 - core index']
  #allocation1 [shape = 'u32[144,128]{1,0:T(1,128)}', space=vmem, size = 0x12000, scoped, tag = 'internal scratch']
  %s0 = inlined_call_operand.vmem [shape: bf16[512,36], index: 0, kind: input, shape index: {}]
  %s1 = inlined_call_operand.vmem [shape: bf16[36,128], index: 1, kind: input, shape index: {}]
  %s2 = inlined_call_operand.vmem [shape: f32[1,128], index: 2, kind: input, shape index: {}]
  %s3 = inlined_call_operand.vmem [shape: f32[512,128], index: 3, kind: output, shape index: {}]
  %s4 = sld [smem:[#allocation0]]
  $region22: #{conv_block_forward.1} parent=0
    _
  %s6 = ssub.s32 1, %s4
  %s7 = scalar_select 0, %s6, %s4
  // Predicated region
  $region2: #{conv_block_forward.1} parent=0 // pred_check
    _
  $region3: #{conv_block_forward.1} parent=0 // pred_check_branch
    %9 = sbr.rel (0) target = $region5
  $region4: #{conv_block_forward.1} parent=0 // pred_region
    _
  $region5: #{conv_block_forward.1} parent=0 // pred_fallthru
    _
  // Predicated region
  $region6: #{conv_block_forward.1} parent=0 // pred_check
    _
  $region7: #{conv_block_forward.1} parent=0 // pred_check_branch
    %11 = sbr.rel (0) target = $region9
  $region8: #{conv_block_forward.1} parent=0 // pred_region
    _
  $region9: #{conv_block_forward.1} parent=0 // pred_fallthru
    _
  // Predicated region
  $region10: #{conv_block_forward.1} parent=0 // pred_check
    _
  $region11: #{conv_block_forward.1} parent=0 // pred_check_branch
    %13 = sbr.rel (0) target = $region13
  $region12: #{conv_block_forward.1} parent=0 // pred_region
    _
  $region13: #{conv_block_forward.1} parent=0 // pred_fallthru
    _
  %v15 = vld [vmem:[%s0] sm:$0xf]
  %v16 = vld [vmem:[%s0 + $0x4] sm:$0xf]
  %v17 = vld [vmem:[%s0 + $0x8] sm:$0xf]
  %v18 = vld [vmem:[%s0 + $0xc] sm:$0xf]
  %v19 = vld [vmem:[%s0 + $0x10] sm:$0xf]
  %v20 = vld [vmem:[%s0 + $0x14] sm:$0xf]
  %v21 = vld [vmem:[%s0 + $0x18] sm:$0xf]
  %v22 = vld [vmem:[%s0 + $0x1c] sm:$0xf]
  %v23 = vld [vmem:[%s0 + $0x20] sm:$0xf]
  %v24 = vld [vmem:[%s0 + $0x24] sm:$0xf]
  %v25 = vld [vmem:[%s0 + $0x28] sm:$0xf]
  %v26 = vld [vmem:[%s0 + $0x2c] sm:$0xf]
  %v27 = vld [vmem:[%s0 + $0x30] sm:$0xf]
  %v28 = vld [vmem:[%s0 + $0x34] sm:$0xf]
  %v29 = vld [vmem:[%s0 + $0x38] sm:$0xf]
  %v30 = vld [vmem:[%s0 + $0x3c] sm:$0xf]
  %v31 = vld [vmem:[%s0 + $0x40] sm:$0xf]
  %v32 = vld [vmem:[%s0 + $0x44] sm:$0xf]
  %v33 = vld [vmem:[%s0 + $0x48] sm:$0xf]
  %v34 = vld [vmem:[%s0 + $0x4c] sm:$0xf]
  %v35 = vld [vmem:[%s0 + $0x50] sm:$0xf]
  %v36 = vld [vmem:[%s0 + $0x54] sm:$0xf]
  %v37 = vld [vmem:[%s0 + $0x58] sm:$0xf]
  %v38 = vld [vmem:[%s0 + $0x5c] sm:$0xf]
  %v39 = vld [vmem:[%s0 + $0x60] sm:$0xf]
  %v40 = vld [vmem:[%s0 + $0x64] sm:$0xf]
  %v41 = vld [vmem:[%s0 + $0x68] sm:$0xf]
  %v42 = vld [vmem:[%s0 + $0x6c] sm:$0xf]
  %v43 = vld [vmem:[%s0 + $0x70] sm:$0xf]
  %v44 = vld [vmem:[%s0 + $0x74] sm:$0xf]
  %v45 = vld [vmem:[%s0 + $0x78] sm:$0xf]
  %v46 = vld [vmem:[%s0 + $0x7c] sm:$0xf]
  %v47 = vld [vmem:[%s0 + $0x80] sm:$0xf]
  %v48 = vld [vmem:[%s0 + $0x84] sm:$0xf]
  %v49 = vld [vmem:[%s0 + $0x88] sm:$0xf]
  %v50 = vld [vmem:[%s0 + $0x8c] sm:$0xf]
  %v51 = vld [vmem:[%s0 + $0x90] sm:$0xf]
  %v52 = vld [vmem:[%s0 + $0x94] sm:$0xf]
  %v53 = vld [vmem:[%s0 + $0x98] sm:$0xf]
  %v54 = vld [vmem:[%s0 + $0x9c] sm:$0xf]
  %v55 = vld [vmem:[%s0 + $0xa0] sm:$0xf]
  %v56 = vld [vmem:[%s0 + $0xa4] sm:$0xf]
  %v57 = vld [vmem:[%s0 + $0xa8] sm:$0xf]
  %v58 = vld [vmem:[%s0 + $0xac] sm:$0xf]
  %v59 = vld [vmem:[%s0 + $0xb0] sm:$0xf]
  %v60 = vld [vmem:[%s0 + $0xb4] sm:$0xf]
  %v61 = vld [vmem:[%s0 + $0xb8] sm:$0xf]
  %v62 = vld [vmem:[%s0 + $0xbc] sm:$0xf]
  %v63 = vld [vmem:[%s0 + $0xc0] sm:$0xf]
  %v64 = vld [vmem:[%s0 + $0xc4] sm:$0xf]
  %v65 = vld [vmem:[%s0 + $0xc8] sm:$0xf]
  %v66 = vld [vmem:[%s0 + $0xcc] sm:$0xf]
  %v67 = vld [vmem:[%s0 + $0xd0] sm:$0xf]
  %v68 = vld [vmem:[%s0 + $0xd4] sm:$0xf]
  %v69 = vld [vmem:[%s0 + $0xd8] sm:$0xf]
  %v70 = vld [vmem:[%s0 + $0xdc] sm:$0xf]
  %v71 = vld [vmem:[%s0 + $0xe0] sm:$0xf]
  %v72 = vld [vmem:[%s0 + $0xe4] sm:$0xf]
  %v73 = vld [vmem:[%s0 + $0xe8] sm:$0xf]
  %v74 = vld [vmem:[%s0 + $0xec] sm:$0xf]
  %v75 = vld [vmem:[%s0 + $0xf0] sm:$0xf]
  %v76 = vld [vmem:[%s0 + $0xf4] sm:$0xf]
  %v77 = vld [vmem:[%s0 + $0xf8] sm:$0xf]
  %v78 = vld [vmem:[%s0 + $0xfc] sm:$0xf]
  %v79 = vld [vmem:[%s1] sm:$0xf]
  %v80 = vld [vmem:[%s1 + $0x4] sm:$0xf]
  %v81 = vld [vmem:[%s1 + $0x8] sm:$0xf]
  %v82 = vld [vmem:[%s1 + $0xc] sm:$0xf]
  %v83 = vld [vmem:[%s1 + $0x10] sm:$0x3]
  %v84 = vld [vmem:[%s2] sm:$0x1]
  %v86 = vlaneseq
  %v87 = vshrl.u32 %v86, 7
  %v88 = vsub.s32 0, %v87
  %v89 = vrot.slane %v84, %v88
  %v155 = vunpack.c.l.b16 %v15
  %v156 = vunpack.c.l.b16 %v16
  %v157 = vunpack.c.l.b16 %v17
  %v158 = vunpack.c.l.b16 %v18
  %v159 = vunpack.c.l.b16 %v19
  %v160 = vunpack.c.l.b16 %v20
  %v161 = vunpack.c.l.b16 %v21
  %v162 = vunpack.c.l.b16 %v22
  %v163 = vunpack.c.l.b16 %v23
  %v164 = vunpack.c.l.b16 %v24
  %v165 = vunpack.c.l.b16 %v25
  %v166 = vunpack.c.l.b16 %v26
  %v167 = vunpack.c.l.b16 %v27
  %v168 = vunpack.c.l.b16 %v28
  %v169 = vunpack.c.l.b16 %v29
  %v170 = vunpack.c.l.b16 %v30
  %v171 = vunpack.c.l.b16 %v31
  %v172 = vunpack.c.l.b16 %v32
  %v173 = vunpack.c.l.b16 %v33
  %v174 = vunpack.c.l.b16 %v34
  %v175 = vunpack.c.l.b16 %v35
  %v176 = vunpack.c.l.b16 %v36
  %v177 = vunpack.c.l.b16 %v37
  %v178 = vunpack.c.l.b16 %v38
  %v179 = vunpack.c.l.b16 %v39
  %v180 = vunpack.c.l.b16 %v40
  %v181 = vunpack.c.l.b16 %v41
  %v182 = vunpack.c.l.b16 %v42
  %v183 = vunpack.c.l.b16 %v43
  %v184 = vunpack.c.l.b16 %v44
  %v185 = vunpack.c.l.b16 %v45
  %v186 = vunpack.c.l.b16 %v46
  %v187 = vunpack.c.l.b16 %v47
  %v188 = vunpack.c.l.b16 %v48
  %v189 = vunpack.c.l.b16 %v49
  %v190 = vunpack.c.l.b16 %v50
  %v191 = vunpack.c.l.b16 %v51
  %v192 = vunpack.c.l.b16 %v52
  %v193 = vunpack.c.l.b16 %v53
  %v194 = vunpack.c.l.b16 %v54
  %v195 = vunpack.c.l.b16 %v55
  %v196 = vunpack.c.l.b16 %v56
  %v197 = vunpack.c.l.b16 %v57
  %v198 = vunpack.c.l.b16 %v58
  %v199 = vunpack.c.l.b16 %v59
  %v200 = vunpack.c.l.b16 %v60
  %v201 = vunpack.c.l.b16 %v61
  %v202 = vunpack.c.l.b16 %v62
  %v203 = vunpack.c.l.b16 %v63
  %v204 = vunpack.c.l.b16 %v64
  %v205 = vunpack.c.l.b16 %v65
  %v206 = vunpack.c.l.b16 %v66
  %v207 = vunpack.c.l.b16 %v67
  %v208 = vunpack.c.l.b16 %v68
  %v209 = vunpack.c.l.b16 %v69
  %v210 = vunpack.c.l.b16 %v70
  %v211 = vunpack.c.l.b16 %v71
  %v212 = vunpack.c.l.b16 %v72
  %v213 = vunpack.c.l.b16 %v73
  %v214 = vunpack.c.l.b16 %v74
  %v215 = vunpack.c.l.b16 %v75
  %v216 = vunpack.c.l.b16 %v76
  %v217 = vunpack.c.l.b16 %v77
  %v218 = vunpack.c.l.b16 %v78
  %v219 = vpack.c.b16 %v156, %v155
  %v220 = vpack.c.b16 %v158, %v157
  %v221 = vpack.c.b16 %v160, %v159
  %v222 = vpack.c.b16 %v162, %v161
  %v223 = vpack.c.b16 %v164, %v163
  %v224 = vpack.c.b16 %v166, %v165
  %v225 = vpack.c.b16 %v168, %v167
  %v226 = vpack.c.b16 %v170, %v169
  %v227 = vpack.c.b16 %v172, %v171
  %v228 = vpack.c.b16 %v174, %v173
  %v229 = vpack.c.b16 %v176, %v175
  %v230 = vpack.c.b16 %v178, %v177
  %v231 = vpack.c.b16 %v180, %v179
  %v232 = vpack.c.b16 %v182, %v181
  %v233 = vpack.c.b16 %v184, %v183
  %v234 = vpack.c.b16 %v186, %v185
  %v235 = vpack.c.b16 %v188, %v187
  %v236 = vpack.c.b16 %v190, %v189
  %v237 = vpack.c.b16 %v192, %v191
  %v238 = vpack.c.b16 %v194, %v193
  %v239 = vpack.c.b16 %v196, %v195
  %v240 = vpack.c.b16 %v198, %v197
  %v241 = vpack.c.b16 %v200, %v199
  %v242 = vpack.c.b16 %v202, %v201
  %v243 = vpack.c.b16 %v204, %v203
  %v244 = vpack.c.b16 %v206, %v205
  %v245 = vpack.c.b16 %v208, %v207
  %v246 = vpack.c.b16 %v210, %v209
  %v247 = vpack.c.b16 %v212, %v211
  %v248 = vpack.c.b16 %v214, %v213
  %v249 = vpack.c.b16 %v216, %v215
  %v250 = vpack.c.b16 %v218, %v217
  %v256 = vunpack.c.l.b16 %v79
  %v257 = vunpack.c.l.b16 %v80
  %v258 = vunpack.c.l.b16 %v81
  %v259 = vunpack.c.l.b16 %v82
  %v260 = vunpack.c.l.b16 %v83
  %v261 = vpack.c.b16 %v257, %v256
  %v262 = vpack.c.b16 %v259, %v258
  %v263 = vpack.c.b16 %v260, %v260
  %vm266 = vcmask 293888
  %v268 = vsel %vm266, %v219, 0
  %v271 = vsel %vm266, %v220, 0
  %v274 = vsel %vm266, %v221, 0
  %v277 = vsel %vm266, %v222, 0
  %v280 = vsel %vm266, %v223, 0
  %v283 = vsel %vm266, %v224, 0
  %v286 = vsel %vm266, %v225, 0
  %v289 = vsel %vm266, %v226, 0
  %v292 = vsel %vm266, %v227, 0
  %v295 = vsel %vm266, %v228, 0
  %v298 = vsel %vm266, %v229, 0
  %v301 = vsel %vm266, %v230, 0
  %v304 = vsel %vm266, %v231, 0
  %v307 = vsel %vm266, %v232, 0
  %v310 = vsel %vm266, %v233, 0
  %v313 = vsel %vm266, %v234, 0
  %v316 = vsel %vm266, %v235, 0
  %v319 = vsel %vm266, %v236, 0
  %v322 = vsel %vm266, %v237, 0
  %v325 = vsel %vm266, %v238, 0
  %v328 = vsel %vm266, %v239, 0
  %v331 = vsel %vm266, %v240, 0
  %v334 = vsel %vm266, %v241, 0
  %v337 = vsel %vm266, %v242, 0
  %v340 = vsel %vm266, %v243, 0
  %v343 = vsel %vm266, %v244, 0
  %v346 = vsel %vm266, %v245, 0
  %v349 = vsel %vm266, %v246, 0
  %v352 = vsel %vm266, %v247, 0
  %v355 = vsel %vm266, %v248, 0
  %v358 = vsel %vm266, %v249, 0
  %v361 = vsel %vm266, %v250, 0
  %vm363 = vcmask 1041408
  %v365 = vsel %vm363, %v263, 0
  %367 = vmatprep.subr.bf16.mxu0 0
  %368 = vmatpush1.bf16.msra.mxu0 %v261
  %369 = vmatprep.subr.bf16.mxu0 0
  %370 = vmatpush1.bf16.msra.mxu0 %v262
  %371 = vmatprep.subr.bf16.mxu0 0
  %372 = vmatpush1.bf16.msra.mxu0 %v365
  %373 = vmatprep.subr.bf16.mxu0 0
  %374 = vmatpush1.bf16.msra.mxu0 0
  %375 = vmatprep.subr.bf16.mxu0 0
  %376 = vmatpush1.bf16.msra.mxu0 0
  %377 = vmatprep.subr.bf16.mxu0 0
  %378 = vmatpush1.bf16.msra.mxu0 0
  %379 = vmatprep.subr.bf16.mxu0 0
  %380 = vmatpush1.bf16.msra.mxu0 0
  %381 = vmatprep.subr.bf16.mxu0 0
  %382 = vmatpush1.bf16.msra.mxu0 0
  %383 = vmatprep.subr.bf16.mxu0 0
  %384 = vmatpush1.bf16.msra.mxu0 0
  %385 = vmatprep.subr.bf16.mxu0 0
  %386 = vmatpush1.bf16.msra.mxu0 0
  %387 = vmatprep.subr.bf16.mxu0 0
  %388 = vmatpush1.bf16.msra.mxu0 0
  %389 = vmatprep.subr.bf16.mxu0 0
  %390 = vmatpush1.bf16.msra.mxu0 0
  %391 = vmatprep.subr.bf16.mxu0 0
  %392 = vmatpush1.bf16.msra.mxu0 0
  %393 = vmatprep.subr.bf16.mxu0 0
  %394 = vmatpush1.bf16.msra.mxu0 0
  %395 = vmatprep.subr.bf16.mxu0 0
  %396 = vmatpush1.bf16.msra.mxu0 0
  %397 = vmatprep.subr.bf16.mxu0 0
  %398 = vmatpush1.bf16.msra.mxu0 0
  %399 = vmatprep.mubr.bf16.mxu0 0
  %400 = vmatmul.mubr.bf16.gmra.mrb[0].mxu0 %v268
  %v401 = vpop.f32.mrb[0].mxu0
  %v402 = vadd.f32 %v89, %v401
  %v403 = vpop.f32.mrb[0].mxu0
  %v404 = vpop.f32.mrb[0].mxu0
  %v405 = vadd.f32 %v89, %v404
  %v406 = vpop.f32.mrb[0].mxu0
  %407 = vmatprep.mubr.bf16.mxu0 0
  %408 = vmatmul.mubr.bf16.gmra.mrb[0].mxu0 %v271
  %v409 = vpop.f32.mrb[0].mxu0
  %v410 = vadd.f32 %v89, %v409
  %v411 = vpop.f32.mrb[0].mxu0
  %v412 = vpop.f32.mrb[0].mxu0
  %v413 = vadd.f32 %v89, %v412
  %v414 = vpop.f32.mrb[0].mxu0
  %415 = vmatprep.mubr.bf16.mxu0 0
  %416 = vmatmul.mubr.bf16.gmra.mrb[0].mxu0 %v274
  %v417 = vpop.f32.mrb[0].mxu0
  %v418 = vadd.f32 %v89, %v417
  %v419 = vpop.f32.mrb[0].mxu0
  %v420 = vpop.f32.mrb[0].mxu0
  %v421 = vadd.f32 %v89, %v420
  %v422 = vpop.f32.mrb[0].mxu0
  %423 = vmatprep.mubr.bf16.mxu0 0
  %424 = vmatmul.mubr.bf16.gmra.mrb[0].mxu0 %v277
  %v425 = vpop.f32.mrb[0].mxu0
  %v426 = vadd.f32 %v89, %v425
  %v427 = vpop.f32.mrb[0].mxu0
  %v428 = vpop.f32.mrb[0].mxu0
  %v429 = vadd.f32 %v89, %v428
  %v430 = vpop.f32.mrb[0].mxu0
  %431 = vmatprep.mubr.bf16.mxu0 0
  %432 = vmatmul.mubr.bf16.gmra.mrb[0].mxu0 %v280
  %v433 = vpop.f32.mrb[0].mxu0
  %v434 = vadd.f32 %v89, %v433
  %v435 = vpop.f32.mrb[0].mxu0
  %v436 = vpop.f32.mrb[0].mxu0
  %v437 = vadd.f32 %v89, %v436
  %v438 = vpop.f32.mrb[0].mxu0
  %439 = vmatprep.mubr.bf16.mxu0 0
  %440 = vmatmul.mubr.bf16.gmra.mrb[0].mxu0 %v283
  %v441 = vpop.f32.mrb[0].mxu0
  %v442 = vadd.f32 %v89, %v441
  %v443 = vpop.f32.mrb[0].mxu0
  %v444 = vpop.f32.mrb[0].mxu0
  %v445 = vadd.f32 %v89, %v444
  %v446 = vpop.f32.mrb[0].mxu0
  %447 = vmatprep.mubr.bf16.mxu0 0
  %448 = vmatmul.mubr.bf16.gmra.mrb[0].mxu0 %v286
  %v449 = vpop.f32.mrb[0].mxu0
  %v450 = vadd.f32 %v89, %v449
  %v451 = vpop.f32.mrb[0].mxu0
  %v452 = vpop.f32.mrb[0].mxu0
  %v453 = vadd.f32 %v89, %v452
  %v454 = vpop.f32.mrb[0].mxu0
  %455 = vmatprep.mubr.bf16.mxu0 0
  %456 = vmatmul.mubr.bf16.gmra.mrb[0].mxu0 %v289
  %v457 = vpop.f32.mrb[0].mxu0
  %v458 = vadd.f32 %v89, %v457
  %v459 = vpop.f32.mrb[0].mxu0
  %v460 = vpop.f32.mrb[0].mxu0
  %v461 = vadd.f32 %v89, %v460
  %v462 = vpop.f32.mrb[0].mxu0
  %463 = vmatprep.mubr.bf16.mxu0 0
  %464 = vmatmul.mubr.bf16.gmra.mrb[0].mxu0 %v292
  %v465 = vpop.f32.mrb[0].mxu0
  %v466 = vadd.f32 %v89, %v465
  %v467 = vpop.f32.mrb[0].mxu0
  %v468 = vpop.f32.mrb[0].mxu0
  %v469 = vadd.f32 %v89, %v468
  %v470 = vpop.f32.mrb[0].mxu0
  %471 = vmatprep.mubr.bf16.mxu0 0
  %472 = vmatmul.mubr.bf16.gmra.mrb[0].mxu0 %v295
  %v473 = vpop.f32.mrb[0].mxu0
  %v474 = vadd.f32 %v89, %v473
  %v475 = vpop.f32.mrb[0].mxu0
  %v476 = vpop.f32.mrb[0].mxu0
  %v477 = vadd.f32 %v89, %v476
  %v478 = vpop.f32.mrb[0].mxu0
  %479 = vmatprep.mubr.bf16.mxu0 0
  %480 = vmatmul.mubr.bf16.gmra.mrb[0].mxu0 %v298
  %v481 = vpop.f32.mrb[0].mxu0
  %v482 = vadd.f32 %v89, %v481
  %v483 = vpop.f32.mrb[0].mxu0
  %v484 = vpop.f32.mrb[0].mxu0
  %v485 = vadd.f32 %v89, %v484
  %v486 = vpop.f32.mrb[0].mxu0
  %487 = vmatprep.mubr.bf16.mxu0 0
  %488 = vmatmul.mubr.bf16.gmra.mrb[0].mxu0 %v301
  %v489 = vpop.f32.mrb[0].mxu0
  %v490 = vadd.f32 %v89, %v489
  %v491 = vpop.f32.mrb[0].mxu0
  %v492 = vpop.f32.mrb[0].mxu0
  %v493 = vadd.f32 %v89, %v492
  %v494 = vpop.f32.mrb[0].mxu0
  %495 = vmatprep.mubr.bf16.mxu0 0
  %496 = vmatmul.mubr.bf16.gmra.mrb[0].mxu0 %v304
  %v497 = vpop.f32.mrb[0].mxu0
  %v498 = vadd.f32 %v89, %v497
  %v499 = vpop.f32.mrb[0].mxu0
  %v500 = vpop.f32.mrb[0].mxu0
  %v501 = vadd.f32 %v89, %v500
  %v502 = vpop.f32.mrb[0].mxu0
  %503 = vmatprep.mubr.bf16.mxu0 0
  %504 = vmatmul.mubr.bf16.gmra.mrb[0].mxu0 %v307
  %v505 = vpop.f32.mrb[0].mxu0
  %v506 = vadd.f32 %v89, %v505
  %v507 = vpop.f32.mrb[0].mxu0
  %v508 = vpop.f32.mrb[0].mxu0
  %v509 = vadd.f32 %v89, %v508
  %v510 = vpop.f32.mrb[0].mxu0
  %511 = vmatprep.mubr.bf16.mxu0 0
  %512 = vmatmul.mubr.bf16.gmra.mrb[0].mxu0 %v310
  %v513 = vpop.f32.mrb[0].mxu0
  %v514 = vadd.f32 %v89, %v513
  %v515 = vpop.f32.mrb[0].mxu0
  %v516 = vpop.f32.mrb[0].mxu0
  %v517 = vadd.f32 %v89, %v516
  %v518 = vpop.f32.mrb[0].mxu0
  %519 = vmatprep.mubr.bf16.mxu0 0
  %520 = vmatmul.mubr.bf16.gmra.mrb[0].mxu0 %v313
  %v521 = vpop.f32.mrb[0].mxu0
  %v522 = vadd.f32 %v89, %v521
  %v523 = vpop.f32.mrb[0].mxu0
  %v524 = vpop.f32.mrb[0].mxu0
  %v525 = vadd.f32 %v89, %v524
  %v526 = vpop.f32.mrb[0].mxu0
  %527 = vmatprep.mubr.bf16.mxu0 0
  %528 = vmatmul.mubr.bf16.gmra.mrb[0].mxu0 %v316
  %v529 = vpop.f32.mrb[0].mxu0
  %v530 = vadd.f32 %v89, %v529
  %v531 = vpop.f32.mrb[0].mxu0
  %v532 = vpop.f32.mrb[0].mxu0
  %v533 = vadd.f32 %v89, %v532
  %v534 = vpop.f32.mrb[0].mxu0
  %535 = vmatprep.mubr.bf16.mxu0 0
  %536 = vmatmul.mubr.bf16.gmra.mrb[0].mxu0 %v319
  %v537 = vpop.f32.mrb[0].mxu0
  %v538 = vadd.f32 %v89, %v537
  %v539 = vpop.f32.mrb[0].mxu0
  %v540 = vpop.f32.mrb[0].mxu0
  %v541 = vadd.f32 %v89, %v540
  %v542 = vpop.f32.mrb[0].mxu0
  %543 = vmatprep.mubr.bf16.mxu0 0
  %544 = vmatmul.mubr.bf16.gmra.mrb[0].mxu0 %v322
  %v545 = vpop.f32.mrb[0].mxu0
  %v546 = vadd.f32 %v89, %v545
  %v547 = vpop.f32.mrb[0].mxu0
  %v548 = vpop.f32.mrb[0].mxu0
  %v549 = vadd.f32 %v89, %v548
  %v550 = vpop.f32.mrb[0].mxu0
  %551 = vmatprep.mubr.bf16.mxu0 0
  %552 = vmatmul.mubr.bf16.gmra.mrb[0].mxu0 %v325
  %v553 = vpop.f32.mrb[0].mxu0
  %v554 = vadd.f32 %v89, %v553
  %v555 = vpop.f32.mrb[0].mxu0
  %v556 = vpop.f32.mrb[0].mxu0
  %v557 = vadd.f32 %v89, %v556
  %v558 = vpop.f32.mrb[0].mxu0
  %559 = vmatprep.mubr.bf16.mxu0 0
  %560 = vmatmul.mubr.bf16.gmra.mrb[0].mxu0 %v328
  %v561 = vpop.f32.mrb[0].mxu0
  %v562 = vadd.f32 %v89, %v561
  %v563 = vpop.f32.mrb[0].mxu0
  %v564 = vpop.f32.mrb[0].mxu0
  %v565 = vadd.f32 %v89, %v564
  %v566 = vpop.f32.mrb[0].mxu0
  %567 = vmatprep.mubr.bf16.mxu0 0
  %568 = vmatmul.mubr.bf16.gmra.mrb[0].mxu0 %v331
  %v569 = vpop.f32.mrb[0].mxu0
  %v570 = vadd.f32 %v89, %v569
  %v571 = vpop.f32.mrb[0].mxu0
  %v572 = vpop.f32.mrb[0].mxu0
  %v573 = vadd.f32 %v89, %v572
  %v574 = vpop.f32.mrb[0].mxu0
  %575 = vmatprep.mubr.bf16.mxu0 0
  %576 = vmatmul.mubr.bf16.gmra.mrb[0].mxu0 %v334
  %v577 = vpop.f32.mrb[0].mxu0
  %v578 = vadd.f32 %v89, %v577
  %v579 = vpop.f32.mrb[0].mxu0
  %v580 = vpop.f32.mrb[0].mxu0
  %v581 = vadd.f32 %v89, %v580
  %v582 = vpop.f32.mrb[0].mxu0
  %583 = vmatprep.mubr.bf16.mxu0 0
  %584 = vmatmul.mubr.bf16.gmra.mrb[0].mxu0 %v337
  %v585 = vpop.f32.mrb[0].mxu0
  %v586 = vadd.f32 %v89, %v585
  %v587 = vpop.f32.mrb[0].mxu0
  %v588 = vpop.f32.mrb[0].mxu0
  %v589 = vadd.f32 %v89, %v588
  %v590 = vpop.f32.mrb[0].mxu0
  %591 = vmatprep.mubr.bf16.mxu0 0
  %592 = vmatmul.mubr.bf16.gmra.mrb[0].mxu0 %v340
  %v593 = vpop.f32.mrb[0].mxu0
  %v594 = vadd.f32 %v89, %v593
  %v595 = vpop.f32.mrb[0].mxu0
  %v596 = vpop.f32.mrb[0].mxu0
  %v597 = vadd.f32 %v89, %v596
  %v598 = vpop.f32.mrb[0].mxu0
  %599 = vmatprep.mubr.bf16.mxu0 0
  %600 = vmatmul.mubr.bf16.gmra.mrb[0].mxu0 %v343
  %v601 = vpop.f32.mrb[0].mxu0
  %v602 = vadd.f32 %v89, %v601
  %v603 = vpop.f32.mrb[0].mxu0
  %v604 = vpop.f32.mrb[0].mxu0
  %v605 = vadd.f32 %v89, %v604
  %v606 = vpop.f32.mrb[0].mxu0
  %607 = vmatprep.mubr.bf16.mxu0 0
  %608 = vmatmul.mubr.bf16.gmra.mrb[0].mxu0 %v346
  %v609 = vpop.f32.mrb[0].mxu0
  %v610 = vadd.f32 %v89, %v609
  %v611 = vpop.f32.mrb[0].mxu0
  %v612 = vpop.f32.mrb[0].mxu0
  %v613 = vadd.f32 %v89, %v612
  %v614 = vpop.f32.mrb[0].mxu0
  %615 = vmatprep.mubr.bf16.mxu0 0
  %616 = vmatmul.mubr.bf16.gmra.mrb[0].mxu0 %v349
  %v617 = vpop.f32.mrb[0].mxu0
  %v618 = vadd.f32 %v89, %v617
  %v619 = vpop.f32.mrb[0].mxu0
  %v620 = vpop.f32.mrb[0].mxu0
  %v621 = vadd.f32 %v89, %v620
  %v622 = vpop.f32.mrb[0].mxu0
  %623 = vmatprep.mubr.bf16.mxu0 0
  %624 = vmatmul.mubr.bf16.gmra.mrb[0].mxu0 %v352
  %v625 = vpop.f32.mrb[0].mxu0
  %v626 = vadd.f32 %v89, %v625
  %v627 = vpop.f32.mrb[0].mxu0
  %v628 = vpop.f32.mrb[0].mxu0
  %v629 = vadd.f32 %v89, %v628
  %v630 = vpop.f32.mrb[0].mxu0
  %631 = vmatprep.mubr.bf16.mxu0 0
  %632 = vmatmul.mubr.bf16.gmra.mrb[0].mxu0 %v355
  %v633 = vpop.f32.mrb[0].mxu0
  %v634 = vadd.f32 %v89, %v633
  %v635 = vpop.f32.mrb[0].mxu0
  %v636 = vpop.f32.mrb[0].mxu0
  %v637 = vadd.f32 %v89, %v636
  %v638 = vpop.f32.mrb[0].mxu0
  %639 = vmatprep.mubr.bf16.mxu0 0
  %640 = vmatmul.mubr.bf16.gmra.mrb[0].mxu0 %v358
  %v641 = vpop.f32.mrb[0].mxu0
  %v642 = vadd.f32 %v89, %v641
  %v643 = vpop.f32.mrb[0].mxu0
  %v644 = vpop.f32.mrb[0].mxu0
  %v645 = vadd.f32 %v89, %v644
  %v646 = vpop.f32.mrb[0].mxu0
  %647 = vmatprep.mubr.bf16.mxu0 0
  %648 = vmatmul.mubr.bf16.gmra.mrb[0].mxu0 %v361
  %v649 = vpop.f32.mrb[0].mxu0
  %v650 = vadd.f32 %v89, %v649
  %v651 = vpop.f32.mrb[0].mxu0
  %v652 = vpop.f32.mrb[0].mxu0
  %v653 = vadd.f32 %v89, %v652
  %v654 = vpop.f32.mrb[0].mxu0
  %655 = vdwg.mxu0
  %656 = vst [vmem:[%s3] sm:$0xff] %v402
  %657 = vst [vmem:[%s3 + $0x8] sm:$0xff] %v405
  %658 = vst [vmem:[%s3 + $0x10] sm:$0xff] %v410
  %659 = vst [vmem:[%s3 + $0x18] sm:$0xff] %v413
  %660 = vst [vmem:[%s3 + $0x20] sm:$0xff] %v418
  %661 = vst [vmem:[%s3 + $0x28] sm:$0xff] %v421
  %662 = vst [vmem:[%s3 + $0x30] sm:$0xff] %v426
  %663 = vst [vmem:[%s3 + $0x38] sm:$0xff] %v429
  %664 = vst [vmem:[%s3 + $0x40] sm:$0xff] %v434
  %665 = vst [vmem:[%s3 + $0x48] sm:$0xff] %v437
  %666 = vst [vmem:[%s3 + $0x50] sm:$0xff] %v442
  %667 = vst [vmem:[%s3 + $0x58] sm:$0xff] %v445
  %668 = vst [vmem:[%s3 + $0x60] sm:$0xff] %v450
  %669 = vst [vmem:[%s3 + $0x68] sm:$0xff] %v453
  %670 = vst [vmem:[%s3 + $0x70] sm:$0xff] %v458
  %671 = vst [vmem:[%s3 + $0x78] sm:$0xff] %v461
  %672 = vst [vmem:[%s3 + $0x80] sm:$0xff] %v466
  %673 = vst [vmem:[%s3 + $0x88] sm:$0xff] %v469
  %674 = vst [vmem:[%s3 + $0x90] sm:$0xff] %v474
  %675 = vst [vmem:[%s3 + $0x98] sm:$0xff] %v477
  %676 = vst [vmem:[%s3 + $0xa0] sm:$0xff] %v482
  %677 = vst [vmem:[%s3 + $0xa8] sm:$0xff] %v485
  %678 = vst [vmem:[%s3 + $0xb0] sm:$0xff] %v490
  %679 = vst [vmem:[%s3 + $0xb8] sm:$0xff] %v493
  %680 = vst [vmem:[%s3 + $0xc0] sm:$0xff] %v498
  %681 = vst [vmem:[%s3 + $0xc8] sm:$0xff] %v501
  %682 = vst [vmem:[%s3 + $0xd0] sm:$0xff] %v506
  %683 = vst [vmem:[%s3 + $0xd8] sm:$0xff] %v509
  %684 = vst [vmem:[%s3 + $0xe0] sm:$0xff] %v514
  %685 = vst [vmem:[%s3 + $0xe8] sm:$0xff] %v517
  %686 = vst [vmem:[%s3 + $0xf0] sm:$0xff] %v522
  %687 = vst [vmem:[%s3 + $0xf8] sm:$0xff] %v525
  %688 = vst [vmem:[%s3 + $0x100] sm:$0xff] %v530
  %689 = vst [vmem:[%s3 + $0x108] sm:$0xff] %v533
  %690 = vst [vmem:[%s3 + $0x110] sm:$0xff] %v538
  %691 = vst [vmem:[%s3 + $0x118] sm:$0xff] %v541
  %692 = vst [vmem:[%s3 + $0x120] sm:$0xff] %v546
  %693 = vst [vmem:[%s3 + $0x128] sm:$0xff] %v549
  %694 = vst [vmem:[%s3 + $0x130] sm:$0xff] %v554
  %695 = vst [vmem:[%s3 + $0x138] sm:$0xff] %v557
  %696 = vst [vmem:[%s3 + $0x140] sm:$0xff] %v562
  %697 = vst [vmem:[%s3 + $0x148] sm:$0xff] %v565
  %698 = vst [vmem:[%s3 + $0x150] sm:$0xff] %v570
  %699 = vst [vmem:[%s3 + $0x158] sm:$0xff] %v573
  %700 = vst [vmem:[%s3 + $0x160] sm:$0xff] %v578
  %701 = vst [vmem:[%s3 + $0x168] sm:$0xff] %v581
  %702 = vst [vmem:[%s3 + $0x170] sm:$0xff] %v586
  %703 = vst [vmem:[%s3 + $0x178] sm:$0xff] %v589
  %704 = vst [vmem:[%s3 + $0x180] sm:$0xff] %v594
  %705 = vst [vmem:[%s3 + $0x188] sm:$0xff] %v597
  %706 = vst [vmem:[%s3 + $0x190] sm:$0xff] %v602
  %707 = vst [vmem:[%s3 + $0x198] sm:$0xff] %v605
  %708 = vst [vmem:[%s3 + $0x1a0] sm:$0xff] %v610
  %709 = vst [vmem:[%s3 + $0x1a8] sm:$0xff] %v613
  %710 = vst [vmem:[%s3 + $0x1b0] sm:$0xff] %v618
  %711 = vst [vmem:[%s3 + $0x1b8] sm:$0xff] %v621
  %712 = vst [vmem:[%s3 + $0x1c0] sm:$0xff] %v626
  %713 = vst [vmem:[%s3 + $0x1c8] sm:$0xff] %v629
  %714 = vst [vmem:[%s3 + $0x1d0] sm:$0xff] %v634
  %715 = vst [vmem:[%s3 + $0x1d8] sm:$0xff] %v637
  %716 = vst [vmem:[%s3 + $0x1e0] sm:$0xff] %v642
  %717 = vst [vmem:[%s3 + $0x1e8] sm:$0xff] %v645
  %718 = vst [vmem:[%s3 + $0x1f0] sm:$0xff] %v650
  %719 = vst [vmem:[%s3 + $0x1f8] sm:$0xff] %v653
  // Predicated region
  $region14: #{conv_block_forward.1} parent=0 // pred_check
    _
  $region15: #{conv_block_forward.1} parent=0 // pred_check_branch
    %721 = sbr.rel (0) target = $region17
  $region16: #{conv_block_forward.1} parent=0 // pred_region
    _
  $region17: #{conv_block_forward.1} parent=0 // pred_fallthru
    _
  // Predicated region
  $region18: #{conv_block_forward.1} parent=0 // pred_check
    _
  $region19: #{conv_block_forward.1} parent=0 // pred_check_branch
    %723 = sbr.rel (0) target = $region21
  $region20: #{conv_block_forward.1} parent=0 // pred_region
    _
  $region21: #{conv_block_forward.1} parent=0 // pred_fallthru
    _

</llo_original>
